<compile_context>
chip_gen: v7x
topology: tpu7x:2x2x1
jax: 0.10.0
libtpu: 0.0.40
codegen_flags: <defaults>
</compile_context>

<pallas_src>
import functools
import math

import jax
import jax.numpy as jnp
from jax.experimental import pallas as pl
from jax.experimental.pallas import tpu as pltpu

EPS = 1e-20
LOG_EPS = math.log(EPS)
NEG_INF = -1e30          # finite "minus infinity" for masked vocab-pad columns


def _round_up(x, m):
    return (x + m - 1) // m * m


# --------------------------------------------------------------------------
# Kernel 1: per-token log prob of the observed token under the LM head
#   grid = (row_tiles [parallel], vocab_tiles [arbitrary / reduction])
# --------------------------------------------------------------------------
def seq_logprob_kernel(h_ref, wcol_ref, wout_ref, out_ref, m_sc, l_sc,
                       *, v_actual, v_padded):
    # h_ref   : (T, D)   bf16  gathered embedding rows   (resident across vocab tiles)
    # wcol_ref: (T, D)   bf16  w_out[:, token] per row   (resident across vocab tiles)
    # wout_ref: (D, Vt)  bf16  one vocab tile of the output projection (streamed)
    # out_ref : (T, 128) f32   per-token log prob, broadcast across lanes
    # m_sc/l_sc: (T, 1)  f32   running max / running sum-exp
    j = pl.program_id(1)

    @pl.when(j == 0)
    def _():
        m_sc[...] = jnp.full_like(m_sc, -jnp.inf)
        l_sc[...] = jnp.zeros_like(l_sc)

    # logits tile: (T, D) @ (D, Vt) on the MXU with f32 accumulation
    logits = jnp.dot(h_ref[...], wout_ref[...],
                     preferred_element_type=jnp.float32)          # (T, Vt)

    # Mask zero-padded vocab columns. Static branch: compiled in only when the
    # vocab dimension actually had to be padded up to a multiple of the tile.
    if v_padded != v_actual:
        T, Vt = logits.shape
        col = j * Vt + jax.lax.broadcasted_iota(jnp.int32, (T, Vt), 1)
        logits = jnp.where(col < v_actual, logits, NEG_INF)

    # streaming (online) logsumexp over the vocab tiles
    m_prev = m_sc[...]
    m_new = jnp.maximum(m_prev, jnp.max(logits, axis=-1, keepdims=True))
    l_sc[...] = (l_sc[...] * jnp.exp(m_prev - m_new)
                 + jnp.sum(jnp.exp(logits - m_new), axis=-1, keepdims=True))
    m_sc[...] = m_new

    @pl.when(j == pl.num_programs(1) - 1)
    def _():
        lse = m_sc[...] + jnp.log(l_sc[...])
        # Observed-token logit, hoisted out of the vocab loop:
        #   picked = h . w_out[:, token]   (same bf16 products, f32 accumulation)
        picked = jnp.sum(h_ref[...].astype(jnp.float32)
                         * wcol_ref[...].astype(jnp.float32),
                         axis=-1, keepdims=True)
        # log(clamp(softmax(logits)[token], eps)) == max(logit - lse, log(eps))
        logp = jnp.maximum(picked - lse, LOG_EPS)
        out_ref[...] = jnp.broadcast_to(logp, out_ref.shape)      # lane-dense store


def _select_tiles(total, V, D, itemsize):
    """Generation-aware (row_tile, vocab_tile, vmem_limit) selection."""
    try:
        vmem_cap = int(pltpu.get_tpu_info().vmem_capacity_bytes)
    except Exception:
        vmem_cap = 64 * 2 ** 20            # conservative fallback (v7x per-TC)
    budget = int(0.70 * vmem_cap)          # headroom for Mosaic internal scratch

    # Roofline crossover for the re-streamed (D, V) head is ~256 rows (v5e),
    # ~700 (v6e), ~310/TC (v7x).  Use 1024 rows when VMEM allows (v5e/v6e,
    # 128 MiB), 512 otherwise (v7x, 64 MiB/TC); cap by the real token count.
    row_target = 1024 if vmem_cap >= 96 * 2 ** 20 else 512
    tile_rows = min(row_target, _round_up(total, 8))

    vt = 512                                # 256-aligned vocab (lane) tile
    if _round_up(V, 128) < vt:
        vt = _round_up(V, 128)

    def est(tr, vtile):
        def blk(r, c, b):
            return _round_up(r, 16) * _round_up(c, 128) * b
        per_step = (2 * blk(tr, D, itemsize)        # h block (double-buffered)
                    + 2 * blk(tr, D, itemsize)      # w_col block
                    + 2 * blk(D, vtile, itemsize)   # W_out tile
                    + 2 * blk(tr, 128, 4))          # out block
        scratch = 2 * blk(tr, 128, 4)               # m, l (lane-padded)
        temp = blk(tr, D, 4)                        # f32 temp for the picked reduce
        return per_step + scratch + temp

    # Shrink vocab tile first, then the row tile, until the working set fits.
    while est(tile_rows, vt) > budget and vt > 128:
        vt = max(128, _round_up(vt // 2, 128))
    while est(tile_rows, vt) > budget and tile_rows > 8:
        tile_rows = max(8, _round_up(tile_rows // 2, 8))

    vmem_limit = min(budget, max(8 * 2 ** 20, 2 * est(tile_rows, vt)))
    return tile_rows, vt, vmem_limit


def seq_logprobs(seq, emb, w_out, *, compute_dtype=jnp.bfloat16):
    """log_prob_from_model_and_seq: per-token log prob under the LM head."""
    B, N = seq.shape
    V, D = emb.shape
    total = B * N
    itemsize = jnp.dtype(compute_dtype).itemsize

    tile_rows, vt, vmem_limit = _select_tiles(total, V, D, itemsize)
    total_pad = _round_up(total, tile_rows)
    v_pad = _round_up(V, vt)
    num_row_tiles = total_pad // tile_rows
    num_v_tiles = v_pad // vt

    seq_flat = jnp.pad(seq.reshape(total).astype(jnp.int32),
                       (0, total_pad - total))
    # Real XLA gathers in the wrapper (no in-kernel one-hot matmuls):
    #   h     = embedding rows of the observed tokens            (total_pad, D)
    #   w_col = output-projection column of the observed tokens  (total_pad, D)
    # Note: jit-mode XLA gather clamps out-of-range token ids (torch would raise).
    h = emb[seq_flat].astype(compute_dtype)
    w_col = w_out.T[seq_flat].astype(compute_dtype)
    w = w_out.astype(compute_dtype)
    if v_pad != V:
        w = jnp.pad(w, ((0, 0), (0, v_pad - V)))   # pad columns masked in-kernel

    cost = pl.CostEstimate(
        flops=2 * total_pad * D * v_pad,
        transcendentals=total_pad * v_pad,
        bytes_accessed=int(2 * total_pad * D * itemsize
                           + num_row_tiles * v_pad * D * itemsize
                           + total_pad * 128 * 4),
    )

    kernel = functools.partial(seq_logprob_kernel, v_actual=V, v_padded=v_pad)
    out = pl.pallas_call(
        kernel,
        out_shape=jax.ShapeDtypeStruct((total_pad, 128), jnp.float32),
        grid_spec=pltpu.PrefetchScalarGridSpec(
            num_scalar_prefetch=0,
            grid=(num_row_tiles, num_v_tiles),
            in_specs=[
                # gathered embedding rows: index constant across the vocab
                # axis, fetched once per row tile.
                pl.BlockSpec((tile_rows, D), lambda i, j: (i, 0)),
                # per-token output-projection column (for the picked logit).
                pl.BlockSpec((tile_rows, D), lambda i, j: (i, 0)),
                # output head streamed one vocab tile at a time.
                # (add pipeline_mode=pl.Buffered(3) here only if profiling shows
                #  exposed DMA and VMEM headroom allows — not needed by default)
                pl.BlockSpec((D, vt), lambda i, j: (0, j)),
            ],
            out_specs=pl.BlockSpec((tile_rows, 128), lambda i, j: (i, 0)),
            scratch_shapes=[pltpu.VMEM((tile_rows, 1), jnp.float32),
                            pltpu.VMEM((tile_rows, 1), jnp.float32)],
        ),
        compiler_params=pltpu.CompilerParams(
            dimension_semantics=("parallel", "arbitrary"),
            vmem_limit_bytes=vmem_limit),
        cost_estimate=cost,
    )(h, w_col, w)
    return out[:total, 0].reshape(B, N)


# --------------------------------------------------------------------------
# Kernel 2: DPO loss (elementwise + masked-mean reduction), tiled over rows
# --------------------------------------------------------------------------
def dpo_loss_kernel(pp_ref, pu_ref, rp_ref, ru_ref, keep_ref, out_ref,
                    num_sc, den_sc, *, beta):
    i = pl.program_id(0)

    @pl.when(i == 0)
    def _():
        num_sc[...] = jnp.zeros_like(num_sc)
        den_sc[...] = jnp.zeros_like(den_sc)

    z = beta * ((pp_ref[...] - pu_ref[...]) - (rp_ref[...] - ru_ref[...]))
    # losses = -logsigmoid(z) = softplus(-z), numerically stable
    losses = jnp.where(z >= 0.0,
                       jnp.log1p(jnp.exp(-z)),
                       -z + jnp.log1p(jnp.exp(z)))
    keep = keep_ref[...]
    num_sc[...] += jnp.sum(losses * keep, axis=(0, 1), keepdims=True)
    den_sc[...] += jnp.sum(keep, axis=(0, 1), keepdims=True)

    @pl.when(i == pl.num_programs(0) - 1)
    def _():
        # NOTE: no guard against den == 0 (same as torch: mean of empty -> nan)
        out_ref[...] = num_sc[...] / den_sc[...]


def dpo_loss(pol_pref, pol_unpref, ref_pref, ref_unpref, keep, *, beta):
    total = pol_pref.size
    LANE = 128
    tr = min(256, max(8, pl.cdiv(total, LANE)))
    tr = _round_up(tr, 8)
    blk = tr * LANE
    flat_len = _round_up(total, blk)
    rows = flat_len // LANE

    def prep(x):
        x = x.reshape(-1).astype(jnp.float32)
        return jnp.pad(x, (0, flat_len - total)).reshape(rows, LANE)

    args = [prep(a) for a in (pol_pref, pol_unpref, ref_pref, ref_unpref, keep)]
    spec = pl.BlockSpec((tr, LANE), lambda i: (i, 0))

    out = pl.pallas_call(
        functools.partial(dpo_loss_kernel, beta=beta),
        out_shape=jax.ShapeDtypeStruct((1, 1), jnp.float32),
        grid_spec=pltpu.PrefetchScalarGridSpec(
            num_scalar_prefetch=0,
            grid=(rows // tr,),
            in_specs=[spec] * 5,
            out_specs=pl.BlockSpec((1, 1), lambda i: (0, 0)),
            scratch_shapes=[pltpu.VMEM((1, 1), jnp.float32),
                            pltpu.VMEM((1, 1), jnp.float32)],
        ),
        compiler_params=pltpu.CompilerParams(
            dimension_semantics=("arbitrary",)),
    )(*args)
    return out[0, 0]


# --------------------------------------------------------------------------
# DPO forward (glue): two models, preferred+unpreferred batched per model
# --------------------------------------------------------------------------
def dpo_forward(policy_params, ref_params, preferred_seq, unpreferred_seq,
                prompt_mask=None, *, beta=0.1):
    assert preferred_seq.ndim == 2
    assert preferred_seq.shape == unpreferred_seq.shape
    B, N = preferred_seq.shape

    # Batch preferred + unpreferred through the LM head together: 2 pallas_calls
    # instead of 4, so each model's head weights stream from HBM only once.
    both = jnp.concatenate([preferred_seq, unpreferred_seq], axis=0)   # (2B, N)

    # ref model is frozen / eval (no grad path in this inference script)
    ref_lp = seq_logprobs(both, *ref_params)
    pol_lp = seq_logprobs(both, *policy_params)
    ref_pref, ref_unpref = ref_lp[:B], ref_lp[B:]
    pol_pref, pol_unpref = pol_lp[:B], pol_lp[B:]

    if prompt_mask is not None:
        keep = (~prompt_mask).astype(jnp.float32)
    else:
        keep = jnp.ones((B, N), jnp.float32)

    return dpo_loss(pol_pref, pol_unpref, ref_pref, ref_unpref, keep, beta=beta)


# --------------------------------------------------------------------------
# Pure-JAX reference (same bf16 matmul precision, for correctness check)
# --------------------------------------------------------------------------
def _ref_seq_logprobs(seq, emb, w_out, compute_dtype=jnp.bfloat16):
    h = emb[seq].astype(compute_dtype)                            # (B, N, D)
    logits = jnp.dot(h, w_out.astype(compute_dtype),
                     preferred_element_type=jnp.float32)          # (B, N, V)
    prob = jax.nn.softmax(logits, axis=-1)
    picked = jnp.take_along_axis(prob, seq[..., None], axis=-1)[..., 0]
    return jnp.log(jnp.clip(picked, EPS))


def _ref_dpo(policy_params, ref_params, pref, unpref, prompt_mask, beta):
    rp = _ref_seq_logprobs(pref, *ref_params)
    ru = _ref_seq_logprobs(unpref, *ref_params)
    pp = _ref_seq_logprobs(pref, *policy_params)
    pu = _ref_seq_logprobs(unpref, *policy_params)
    losses = -jax.nn.log_sigmoid(beta * ((pp - pu) - (rp - ru)))
    keep = ~prompt_mask
    return jnp.sum(jnp.where(keep, losses, 0.0)) / jnp.sum(keep)


if __name__ == "__main__":
    B, N, V, D = 2, 8, 256, 32
    beta = 0.1

    key = jax.random.PRNGKey(0)
    k_emb, k_out, k_pref, k_unpref, k_drift = jax.random.split(key, 5)

    # Policy model parameters (deterministic init).
    pol_emb = jax.random.normal(k_emb, (V, D), jnp.float32) * 0.02
    pol_wout = jax.random.normal(k_out, (D, V), jnp.float32) * 0.02

    # ref_model = deepcopy(policy_model) at __init__ (then frozen).
    ref_emb = pol_emb
    ref_wout = pol_wout

    # Simulate a policy that has drifted after a few training steps so the
    # forward output is non-trivial (forward semantics are identical either way).
    pol_wout = pol_wout + jax.random.normal(k_drift, (D, V), jnp.float32) * 0.05

    policy_params = (pol_emb, pol_wout)
    ref_params = (ref_emb, ref_wout)

    preferred_seq = jax.random.randint(k_pref, (B, N), 0, V, jnp.int32)
    unpreferred_seq = jax.random.randint(k_unpref, (B, N), 0, V, jnp.int32)
    # First 3 positions are prompt tokens -> excluded from the loss mean.
    prompt_mask = jnp.broadcast_to(jnp.arange(N)[None, :] < 3, (B, N))

    loss = dpo_forward(policy_params, ref_params, preferred_seq,
                       unpreferred_seq, prompt_mask, beta=beta)
    loss = jax.block_until_ready(loss)

    ref_loss = _ref_dpo(policy_params, ref_params, preferred_seq,
                        unpreferred_seq, prompt_mask, beta)

    if not jnp.allclose(loss, ref_loss, rtol=1e-3, atol=1e-3):
        raise AssertionError(f"mismatch: pallas={loss} ref={ref_loss}")
    print("KERNEL_OK")
</pallas_src>

<mosaic_0001>
module attributes {stable_mosaic.version = 11 : i64} {
  func.func @seq_logprob_kernel(%arg0: i32, %arg1: i32, %arg2: memref<32x32xbf16, #tpu.memory_space<vmem>>, %arg3: memref<32x32xbf16, #tpu.memory_space<vmem>>, %arg4: memref<32x256xbf16, #tpu.memory_space<vmem>>, %arg5: memref<32x128xf32, #tpu.memory_space<vmem>>, %arg6: memref<32x1xf32, #tpu.memory_space<vmem>>, %arg7: memref<32x1xf32, #tpu.memory_space<vmem>>) attributes {dimension_semantics = [#tpu.dimension_semantics<parallel>, #tpu.dimension_semantics<arbitrary>], iteration_bounds = array<i64: 1, 1>, scalar_prefetch = 0 : i64, scratch_operands = 2 : i64, tpu.core_type = #tpu.core_type<tc>, window_params = [{transform_indices = @transform_0, window_bounds = array<i64: 32, 32>}, {transform_indices = @transform_1, window_bounds = array<i64: 32, 32>}, {transform_indices = @transform_2, window_bounds = array<i64: 32, 256>}, {transform_indices = @transform_3, window_bounds = array<i64: 32, 128>}]} {
    %c0_i32 = arith.constant 0 : i32
    %0 = arith.cmpi eq, %arg1, %c0_i32 : i32
    %1 = arith.extui %0 : i1 to i32
    %c0_i32_0 = arith.constant 0 : i32
    %2 = arith.cmpi ne, %1, %c0_i32_0 : i32
    scf.if %2 {
      %cst_16 = arith.constant 0xFF800000 : f32
      %25 = vector.broadcast %cst_16 : f32 to vector<32x1xf32>
      %c0_17 = arith.constant 0 : index
      %c0_18 = arith.constant 0 : index
      %26 = vector.load %arg6[%c0_17, %c0_18] : memref<32x1xf32, #tpu.memory_space<vmem>>, vector<32x1xf32>
      tpu.vector_store %arg6[%c0_17, %c0_18], %25 {strides = array<i32>} : memref<32x1xf32, #tpu.memory_space<vmem>>, vector<32x1xf32>,
      %cst_19 = arith.constant 0.000000e+00 : f32
      %27 = vector.broadcast %cst_19 : f32 to vector<32x1xf32>
      %c0_20 = arith.constant 0 : index
      %c0_21 = arith.constant 0 : index
      %28 = vector.load %arg7[%c0_20, %c0_21] : memref<32x1xf32, #tpu.memory_space<vmem>>, vector<32x1xf32>
      tpu.vector_store %arg7[%c0_20, %c0_21], %27 {strides = array<i32>} : memref<32x1xf32, #tpu.memory_space<vmem>>, vector<32x1xf32>,
    } else {
    }
    %c0 = arith.constant 0 : index
    %c0_1 = arith.constant 0 : index
    %3 = vector.load %arg2[%c0, %c0_1] : memref<32x32xbf16, #tpu.memory_space<vmem>>, vector<32x32xbf16>
    %c0_2 = arith.constant 0 : index
    %c0_3 = arith.constant 0 : index
    %4 = vector.load %arg4[%c0_2, %c0_3] : memref<32x256xbf16, #tpu.memory_space<vmem>>, vector<32x256xbf16>
    %cst = arith.constant dense<0.000000e+00> : vector<32x256xf32>
    %5 = tpu.matmul %3, %4, %cst {dimension_numbers = #tpu.dot_dimension_numbers<[1], [0], [0], [1], [0, 0, 1, 1], [], []>} : vector<32x32xbf16>, vector<32x256xbf16>, vector<32x256xf32> -> vector<32x256xf32>
    %c0_4 = arith.constant 0 : index
    %c0_5 = arith.constant 0 : index
    %6 = vector.load %arg6[%c0_4, %c0_5] : memref<32x1xf32, #tpu.memory_space<vmem>>, vector<32x1xf32>
    %cst_6 = arith.constant dense<0xFF800000> : vector<32xf32>
    %7 = vector.multi_reduction <maximumf>, %5, %cst_6 [1] : vector<32x256xf32> to vector<32xf32>
    %8 = vector.shape_cast %7 : vector<32xf32> to vector<32x1xf32>
    %9 = arith.maximumf %6, %8 : vector<32x1xf32>
    %c0_7 = arith.constant 0 : index
    %c0_8 = arith.constant 0 : index
    %10 = vector.load %arg7[%c0_7, %c0_8] : memref<32x1xf32, #tpu.memory_space<vmem>>, vector<32x1xf32>
    %11 = arith.subf %6, %9 : vector<32x1xf32>
    %12 = math.exp %11 : vector<32x1xf32>
    %13 = arith.mulf %10, %12 : vector<32x1xf32>
    %14 = vector.broadcast %9 : vector<32x1xf32> to vector<32x256xf32>
    %15 = arith.subf %5, %14 : vector<32x256xf32>
    %16 = math.exp %15 : vector<32x256xf32>
    %cst_9 = arith.constant dense<0.000000e+00> : vector<32xf32>
    %17 = vector.multi_reduction <add>, %16, %cst_9 [1] : vector<32x256xf32> to vector<32xf32>
    %18 = vector.shape_cast %17 : vector<32xf32> to vector<32x1xf32>
    %19 = arith.addf %13, %18 : vector<32x1xf32>
    %c0_10 = arith.constant 0 : index
    %c0_11 = arith.constant 0 : index
    %20 = vector.load %arg7[%c0_10, %c0_11] : memref<32x1xf32, #tpu.memory_space<vmem>>, vector<32x1xf32>
    tpu.vector_store %arg7[%c0_10, %c0_11], %19 {strides = array<i32>} : memref<32x1xf32, #tpu.memory_space<vmem>>, vector<32x1xf32>,
    %c0_12 = arith.constant 0 : index
    %c0_13 = arith.constant 0 : index
    %21 = vector.load %arg6[%c0_12, %c0_13] : memref<32x1xf32, #tpu.memory_space<vmem>>, vector<32x1xf32>
    tpu.vector_store %arg6[%c0_12, %c0_13], %9 {strides = array<i32>} : memref<32x1xf32, #tpu.memory_space<vmem>>, vector<32x1xf32>,
    %c0_i32_14 = arith.constant 0 : i32
    %22 = arith.cmpi eq, %arg1, %c0_i32_14 : i32
    %23 = arith.extui %22 : i1 to i32
    %c0_i32_15 = arith.constant 0 : i32
    %24 = arith.cmpi ne, %23, %c0_i32_15 : i32
    scf.if %24 {
      %c0_16 = arith.constant 0 : index
      %c0_17 = arith.constant 0 : index
      %25 = vector.load %arg6[%c0_16, %c0_17] : memref<32x1xf32, #tpu.memory_space<vmem>>, vector<32x1xf32>
      %c0_18 = arith.constant 0 : index
      %c0_19 = arith.constant 0 : index
      %26 = vector.load %arg7[%c0_18, %c0_19] : memref<32x1xf32, #tpu.memory_space<vmem>>, vector<32x1xf32>
      %27 = math.log %26 : vector<32x1xf32>
      %28 = arith.addf %25, %27 : vector<32x1xf32>
      %c0_20 = arith.constant 0 : index
      %c0_21 = arith.constant 0 : index
      %29 = vector.load %arg2[%c0_20, %c0_21] : memref<32x32xbf16, #tpu.memory_space<vmem>>, vector<32x32xbf16>
      %30 = arith.extf %29 : vector<32x32xbf16> to vector<32x32xf32>
      %c0_22 = arith.constant 0 : index
      %c0_23 = arith.constant 0 : index
      %31 = vector.load %arg3[%c0_22, %c0_23] : memref<32x32xbf16, #tpu.memory_space<vmem>>, vector<32x32xbf16>
      %32 = arith.extf %31 : vector<32x32xbf16> to vector<32x32xf32>
      %33 = arith.mulf %30, %32 : vector<32x32xf32>
      %cst_24 = arith.constant dense<0.000000e+00> : vector<32xf32>
      %34 = vector.multi_reduction <add>, %33, %cst_24 [1] : vector<32x32xf32> to vector<32xf32>
      %35 = vector.shape_cast %34 : vector<32xf32> to vector<32x1xf32>
      %36 = arith.subf %35, %28 : vector<32x1xf32>
      %cst_25 = arith.constant -4.605170e+01 : f32
      %37 = vector.broadcast %cst_25 : f32 to vector<32x1xf32>
      %38 = arith.maximumf %36, %37 : vector<32x1xf32>
      %39 = vector.shape_cast %38 : vector<32x1xf32> to vector<32x1xf32>
      %40 = vector.broadcast %39 : vector<32x1xf32> to vector<32x128xf32>
      %c0_26 = arith.constant 0 : index
      %c0_27 = arith.constant 0 : index
      %41 = vector.load %arg5[%c0_26, %c0_27] : memref<32x128xf32, #tpu.memory_space<vmem>>, vector<32x128xf32>
      tpu.vector_store %arg5[%c0_26, %c0_27], %40 {strides = array<i32>} : memref<32x128xf32, #tpu.memory_space<vmem>>, vector<32x128xf32>,
    } else {
    }
    return
  }
  func.func @transform_0(%arg0: i32, %arg1: i32) -> (i32, i32) {
    %c0_i32 = arith.constant 0 : i32
    %c0_i32_0 = arith.constant 0 : i32
    return %arg0, %c0_i32 : i32, i32
  }
  func.func @transform_1(%arg0: i32, %arg1: i32) -> (i32, i32) {
    %c0_i32 = arith.constant 0 : i32
    %c0_i32_0 = arith.constant 0 : i32
    return %arg0, %c0_i32 : i32, i32
  }
  func.func @transform_2(%arg0: i32, %arg1: i32) -> (i32, i32) {
    %c0_i32 = arith.constant 0 : i32
    %c0_i32_0 = arith.constant 0 : i32
    return %c0_i32, %arg1 : i32, i32
  }
  func.func @transform_3(%arg0: i32, %arg1: i32) -> (i32, i32) {
    %c0_i32 = arith.constant 0 : i32
    %c0_i32_0 = arith.constant 0 : i32
    return %arg0, %c0_i32 : i32, i32
  }
}

</mosaic_0001>

<llo_original>
// kernel: tpu_custom_call.1
$region0: #{tpu_custom_call.1}
  #allocation0 [shape = 'u32[]', space=smem, size = 0x4, offset = 0x4, fixed_abs, tag = 'smem constant byte address 0x4 - core index']
  #allocation1 [shape = 'u32[144,128]{1,0:T(1,128)}', space=vmem, size = 0x12000, scoped, tag = 'internal scratch']
  #allocation2 [shape = 'f32[32,1]{1,0:T(8,128)}', space=vmem, size = 0x4000, scoped, tag = 'scratch operand']
  #allocation3 [shape = 'f32[32,1]{1,0:T(8,128)}', space=vmem, size = 0x4000, scoped, tag = 'scratch operand']
  %s0 = inlined_call_operand.hbm [shape: bf16[32,32], index: 0, kind: input, shape index: {}]
  %s1 = inlined_call_operand.hbm [shape: bf16[32,32], index: 1, kind: input, shape index: {}]
  %s2 = inlined_call_operand.hbm [shape: bf16[32,256], index: 2, kind: input, shape index: {}]
  %s3 = inlined_call_operand.hbm [shape: f32[32,128], index: 3, kind: output, shape index: {}]
  %s4 = sld [smem:[#allocation0]]
  $region42: #{tpu_custom_call.1} parent=0
    _
  %s6 = ssub.s32 1, %s4
  %s7 = scalar_select 0, %s6, %s4
  $region1: #{tpu_custom_call.1} parent=0
    #allocation4 [shape = 'u8[8192]{0}', space=vmem, size = 0x2000, scoped, tag = 'input window, operand 0, single buffered']
    #allocation5 [shape = 's32[1]{0}', space=sflag, size = 0x4, scoped, tag = 'scoped memory for tpu_custom_call.1']
    #allocation6 [shape = 's32[1]{0}', space=sflag, size = 0x4, scoped, tag = 'scoped memory for tpu_custom_call.1']
    #allocation7 [shape = 'u8[8192]{0}', space=vmem, size = 0x2000, scoped, tag = 'input window, operand 1, single buffered']
    #allocation8 [shape = 's32[1]{0}', space=sflag, size = 0x4, scoped, tag = 'scoped memory for tpu_custom_call.1']
    #allocation9 [shape = 'u8[16384]{0}', space=vmem, size = 0x4000, scoped, tag = 'input window, operand 2, single buffered']
    #allocation10 [shape = 'u8[16384]{0}', space=vmem, size = 0x4000, scoped, tag = 'output window, operand 0, single buffered']
    %8 = vsyncpa [#allocation5], 0
    %9 = vsyncpa [#allocation8], 0
    %10 = vsyncpa [#allocation6], 0
    // Predicated region
    $region2: #{tpu_custom_call.1} parent=1 // pred_check
      _
    $region3: #{tpu_custom_call.1} parent=1 // pred_check_branch
      %12 = sbr.rel (0) target = $region5
    $region4: #{tpu_custom_call.1} parent=1 // pred_region
      %s14 = ssub.s32 256, 256
      %15 = vsyncadd [#allocation5], %s14
      %s16 = sshll.u32 [#allocation4], 4
      %s17 = int_to_ptr.vmem [resolvable:$true] %s16
      %22 = dma.hbm_to_vmem [thread:$0]  %s0, 256, %s17, [#allocation5], 64, 64, 4
    $region5: #{tpu_custom_call.1} parent=1 // pred_fallthru
      _
    // Predicated region
    $region6: #{tpu_custom_call.1} parent=1 // pred_check
      _
    $region7: #{tpu_custom_call.1} parent=1 // pred_check_branch
      %24 = sbr.rel (0) target = $region9
    $region8: #{tpu_custom_call.1} parent=1 // pred_region
      %s26 = ssub.s32 256, 256
      %27 = vsyncadd [#allocation8], %s26
      %s28 = sshll.u32 [#allocation7], 4
      %s29 = int_to_ptr.vmem [resolvable:$true] %s28
      %34 = dma.hbm_to_vmem [thread:$0]  %s1, 256, %s29, [#allocation8], 64, 64, 4
    $region9: #{tpu_custom_call.1} parent=1 // pred_fallthru
      _
    // Predicated region
    $region10: #{tpu_custom_call.1} parent=1 // pred_check
      _
    $region11: #{tpu_custom_call.1} parent=1 // pred_check_branch
      %36 = sbr.rel (0) target = $region13
    $region12: #{tpu_custom_call.1} parent=1 // pred_region
      %s38 = ssub.s32 512, 512
      %39 = vsyncadd [#allocation8], %s38
      %s40 = sshll.u32 [#allocation9], 4
      %s41 = int_to_ptr.vmem [resolvable:$true] %s40
      %46 = dma.hbm_to_vmem [thread:$0]  %s2, 512, %s41, [#allocation8], 128, 128, 8
    $region13: #{tpu_custom_call.1} parent=1 // pred_fallthru
      _
    // Predicated region
    $region14: #{tpu_custom_call.1} parent=1 // pred_check
      _
    $region15: #{tpu_custom_call.1} parent=1 // pred_check_branch
      %48 = sbr.rel (0) target = $region17
    $region16: #{tpu_custom_call.1} parent=1 // pred_region
      %49 = dma.done [#allocation5], 256
    $region17: #{tpu_custom_call.1} parent=1 // pred_fallthru
      _
    // Predicated region
    $region18: #{tpu_custom_call.1} parent=1 // pred_check
      _
    $region19: #{tpu_custom_call.1} parent=1 // pred_check_branch
      %51 = sbr.rel (0) target = $region21
    $region20: #{tpu_custom_call.1} parent=1 // pred_region
      %52 = dma.done [#allocation8], 256
    $region21: #{tpu_custom_call.1} parent=1 // pred_fallthru
      _
    // Predicated region
    $region22: #{tpu_custom_call.1} parent=1 // pred_check
      _
    $region23: #{tpu_custom_call.1} parent=1 // pred_check_branch
      %54 = sbr.rel (0) target = $region25
    $region24: #{tpu_custom_call.1} parent=1 // pred_region
      %55 = dma.done [#allocation8], 512
    $region25: #{tpu_custom_call.1} parent=1 // pred_fallthru
      _
    %p57 = scmp.eq.s32.totalorder 0, 0
    // Predicated region
    $region26: #{tpu_custom_call.1} parent=1 // pred_check
      %p58 = pneg %p57
    $region27: #{tpu_custom_call.1} parent=1 // pred_check_branch
      %60 = sbr.rel (%p58) target = $region29
    $region28: #{tpu_custom_call.1} parent=1 // pred_region
      %vm61 = vcmask 7168
      %62 = vst.msk [vmem:[#allocation2] sm:$0xff] %vm61, -inf
      %63 = vst.msk [vmem:[#allocation2 + $0x8] sm:$0xff] %vm61, -inf
      %64 = vst.msk [vmem:[#allocation2 + $0x10] sm:$0xff] %vm61, -inf
      %65 = vst.msk [vmem:[#allocation2 + $0x18] sm:$0xff] %vm61, -inf
      %66 = vst.msk [vmem:[#allocation3] sm:$0xff] %vm61, 0.0
      %67 = vst.msk [vmem:[#allocation3 + $0x8] sm:$0xff] %vm61, 0.0
      %68 = vst.msk [vmem:[#allocation3 + $0x10] sm:$0xff] %vm61, 0.0
      %69 = vst.msk [vmem:[#allocation3 + $0x18] sm:$0xff] %vm61, 0.0
    $region29: #{tpu_custom_call.1} parent=1 // pred_fallthru
      _
    %v70 = vld [vmem:[#allocation4] sm:$0xf]
    %v71 = vld [vmem:[#allocation4 + $0x4] sm:$0xf]
    %v72 = vld [vmem:[#allocation4 + $0x8] sm:$0xf]
    %v73 = vld [vmem:[#allocation4 + $0xc] sm:$0xf]
    %v74 = vld [vmem:[#allocation9] sm:$0xff]
    %v75 = vld [vmem:[#allocation9 + $0x8] sm:$0xff]
    %v76 = vld [vmem:[#allocation9 + $0x10] sm:$0xff]
    %v77 = vld [vmem:[#allocation9 + $0x18] sm:$0xff]
    %v82 = vunpack.c.l.b16 %v70
    %v83 = vunpack.c.l.b16 %v71
    %v84 = vunpack.c.l.b16 %v72
    %v85 = vunpack.c.l.b16 %v73
    %v86 = vpack.c.b16 %v83, %v82
    %v87 = vpack.c.b16 %v85, %v84
    %v92 = vunpack.c.l.b16 %v74
    %v93 = vunpack.c.h.b16 %v74
    %v94 = vunpack.c.l.b16 %v75
    %v95 = vunpack.c.h.b16 %v75
    %v96 = vunpack.c.l.b16 %v76
    %v97 = vunpack.c.h.b16 %v76
    %v98 = vunpack.c.l.b16 %v77
    %v99 = vunpack.c.h.b16 %v77
    %v100 = vpack.c.b16 %v94, %v92
    %v101 = vpack.c.b16 %v95, %v93
    %v102 = vpack.c.b16 %v98, %v96
    %v103 = vpack.c.b16 %v99, %v97
    %vm108 = vcmask 261120
    %v110 = vsel %vm108, %v86, 0
    %v113 = vsel %vm108, %v87, 0
    %115 = vmatprep.subr.bf16.mxu0 %v101
    %116 = vmatpush1.bf16.msra.mxu0 %v100
    %117 = vmatprep.subr.bf16.mxu0 %v103
    %118 = vmatpush1.bf16.msra.mxu0 %v102
    %119 = vmatprep.subr.bf16.mxu0 0
    %120 = vmatpush1.bf16.msra.mxu0 0
    %121 = vmatprep.subr.bf16.mxu0 0
    %122 = vmatpush1.bf16.msra.mxu0 0
    %123 = vmatprep.subr.bf16.mxu0 0
    %124 = vmatpush1.bf16.msra.mxu0 0
    %125 = vmatprep.subr.bf16.mxu0 0
    %126 = vmatpush1.bf16.msra.mxu0 0
    %127 = vmatprep.subr.bf16.mxu0 0
    %128 = vmatpush1.bf16.msra.mxu0 0
    %129 = vmatprep.subr.bf16.mxu0 0
    %130 = vmatpush1.bf16.msra.mxu0 0
    %131 = vmatprep.subr.bf16.mxu0 0
    %132 = vmatpush1.bf16.msra.mxu0 0
    %133 = vmatprep.subr.bf16.mxu0 0
    %134 = vmatpush1.bf16.msra.mxu0 0
    %135 = vmatprep.subr.bf16.mxu0 0
    %136 = vmatpush1.bf16.msra.mxu0 0
    %137 = vmatprep.subr.bf16.mxu0 0
    %138 = vmatpush1.bf16.msra.mxu0 0
    %139 = vmatprep.subr.bf16.mxu0 0
    %140 = vmatpush1.bf16.msra.mxu0 0
    %141 = vmatprep.subr.bf16.mxu0 0
    %142 = vmatpush1.bf16.msra.mxu0 0
    %143 = vmatprep.subr.bf16.mxu0 0
    %144 = vmatpush1.bf16.msra.mxu0 0
    %145 = vmatprep.subr.bf16.mxu0 0
    %146 = vmatpush1.bf16.msra.mxu0 0
    %147 = vmatprep.mubr.bf16.mxu0 0
    %148 = vmatmul.mubr.bf16.gmra.mrb[0].mxu0 %v110
    %v149 = vpop.f32.mrb[0].mxu0
    %v150 = vadd.f32 0.0, %v149
    %v151 = vpop.f32.mrb[0].mxu0
    %v152 = vadd.f32 0.0, %v151
    %v153 = vpop.f32.mrb[0].mxu0
    %v154 = vadd.f32 0.0, %v153
    %v155 = vpop.f32.mrb[0].mxu0
    %v156 = vadd.f32 0.0, %v155
    %157 = vmatprep.mubr.bf16.mxu0 0
    %158 = vmatmul.mubr.bf16.gmra.mrb[0].mxu0 %v113
    %v159 = vpop.f32.mrb[0].mxu0
    %v160 = vadd.f32 0.0, %v159
    %v161 = vpop.f32.mrb[0].mxu0
    %v162 = vadd.f32 0.0, %v161
    %v163 = vpop.f32.mrb[0].mxu0
    %v164 = vadd.f32 0.0, %v163
    %v165 = vpop.f32.mrb[0].mxu0
    %v166 = vadd.f32 0.0, %v165
    %167 = vdwg.mxu0
    %v168 = vld [vmem:[#allocation2] sm:$0xff]
    %v169 = vld [vmem:[#allocation2 + $0x8] sm:$0xff]
    %v170 = vld [vmem:[#allocation2 + $0x10] sm:$0xff]
    %v171 = vld [vmem:[#allocation2 + $0x18] sm:$0xff]
    %v172 = vmax.f32 %v150, %v152
    %173 = vmax.xlane.f32.xlu0 %v172
    %v174 = vpop.xlane.xlu0 %173
    %v175 = vmax.f32 %v154, %v156
    %176 = vmax.xlane.f32.xlu0 %v175
    %v177 = vpop.xlane.xlu0 %176
    %v178 = vmax.f32 %v160, %v162
    %179 = vmax.xlane.f32.xlu0 %v178
    %v180 = vpop.xlane.xlu0 %179
    %v181 = vmax.f32 %v164, %v166
    %182 = vmax.xlane.f32.xlu0 %v181
    %v183 = vpop.xlane.xlu0 %182
    %v184 = vmax.f32 %v168, %v174
    %v185 = vmax.f32 %v169, %v177
    %v186 = vmax.f32 %v170, %v180
    %v187 = vmax.f32 %v171, %v183
    %v188 = vld [vmem:[#allocation3] sm:$0xff]
    %v189 = vld [vmem:[#allocation3 + $0x8] sm:$0xff]
    %v190 = vld [vmem:[#allocation3 + $0x10] sm:$0xff]
    %v191 = vld [vmem:[#allocation3 + $0x18] sm:$0xff]
    %v192 = vsub.f32 %v168, %v184
    %v193 = vsub.f32 %v169, %v185
    %v194 = vsub.f32 %v170, %v186
    %v195 = vsub.f32 %v171, %v187
    %v196 = vmul.f32 %v192, 1.442695
    %v197 = vpow.pop %v196
    %v198 = vmul.f32 %v193, 1.442695
    %v199 = vpow.pop %v198
    %v200 = vmul.f32 %v194, 1.442695
    %v201 = vpow.pop %v200
    %v202 = vmul.f32 %v195, 1.442695
    %v203 = vpow.pop %v202
    %v204 = vmul.f32 %v188, %v197
    %v205 = vmul.f32 %v189, %v199
    %v206 = vmul.f32 %v190, %v201
    %v207 = vmul.f32 %v191, %v203
    %209 = vset.pattern.permute.xlu0 0
    %210 = vperm.xlu0 %209, %v184
    %v211 = vpop.permute.xlu0 %210
    %214 = vset.pattern.permute.xlu0 0
    %215 = vperm.xlu0 %214, %v185
    %v216 = vpop.permute.xlu0 %215
    %219 = vset.pattern.permute.xlu0 0
    %220 = vperm.xlu0 %219, %v186
    %v221 = vpop.permute.xlu0 %220
    %224 = vset.pattern.permute.xlu0 0
    %225 = vperm.xlu0 %224, %v187
    %v226 = vpop.permute.xlu0 %225
    %v228 = vsub.f32 %v150, %v211
    %v229 = vsub.f32 %v152, %v211
    %v230 = vsub.f32 %v154, %v216
    %v231 = vsub.f32 %v156, %v216
    %v232 = vsub.f32 %v160, %v221
    %v233 = vsub.f32 %v162, %v221
    %v234 = vsub.f32 %v164, %v226
    %v235 = vsub.f32 %v166, %v226
    %v236 = vmul.f32 %v228, 1.442695
    %v237 = vpow.pop %v236
    %v238 = vmul.f32 %v229, 1.442695
    %v239 = vpow.pop %v238
    %v240 = vmul.f32 %v230, 1.442695
    %v241 = vpow.pop %v240
    %v242 = vmul.f32 %v231, 1.442695
    %v243 = vpow.pop %v242
    %v244 = vmul.f32 %v232, 1.442695
    %v245 = vpow.pop %v244
    %v246 = vmul.f32 %v233, 1.442695
    %v247 = vpow.pop %v246
    %v248 = vmul.f32 %v234, 1.442695
    %v249 = vpow.pop %v248
    %v250 = vmul.f32 %v235, 1.442695
    %v251 = vpow.pop %v250
    %v252 = vadd.f32 %v237, %v239
    %253 = vadd.xlane.f32.xlu0 %v252
    %v254 = vpop.xlane.xlu0 %253
    %v255 = vadd.f32 %v241, %v243
    %256 = vadd.xlane.f32.xlu0 %v255
    %v257 = vpop.xlane.xlu0 %256
    %v258 = vadd.f32 %v245, %v247
    %259 = vadd.xlane.f32.xlu0 %v258
    %v260 = vpop.xlane.xlu0 %259
    %v261 = vadd.f32 %v249, %v251
    %262 = vadd.xlane.f32.xlu0 %v261
    %v263 = vpop.xlane.xlu0 %262
    %v264 = vadd.f32 %v204, %v254
    %v265 = vadd.f32 %v205, %v257
    %v266 = vadd.f32 %v206, %v260
    %v267 = vadd.f32 %v207, %v263
    %vm268 = vcmask 7168
    %269 = vst.msk [vmem:[#allocation3] sm:$0xff] %vm268, %v264
    %270 = vst.msk [vmem:[#allocation3 + $0x8] sm:$0xff] %vm268, %v265
    %271 = vst.msk [vmem:[#allocation3 + $0x10] sm:$0xff] %vm268, %v266
    %272 = vst.msk [vmem:[#allocation3 + $0x18] sm:$0xff] %vm268, %v267
    %273 = vst.msk [vmem:[#allocation2] sm:$0xff] %vm268, %v184
    %274 = vst.msk [vmem:[#allocation2 + $0x8] sm:$0xff] %vm268, %v185
    %275 = vst.msk [vmem:[#allocation2 + $0x10] sm:$0xff] %vm268, %v186
    %276 = vst.msk [vmem:[#allocation2 + $0x18] sm:$0xff] %vm268, %v187
    // Predicated region
    $region30: #{tpu_custom_call.1} parent=1 // pred_check
      %p277 = pneg %p57
    $region31: #{tpu_custom_call.1} parent=1 // pred_check_branch
      %279 = sbr.rel (%p277) target = $region33
    $region32: #{tpu_custom_call.1} parent=1 // pred_region
      %v280 = vld [vmem:[#allocation2] sm:$0xff]
      %v281 = vld [vmem:[#allocation2 + $0x8] sm:$0xff]
      %v282 = vld [vmem:[#allocation2 + $0x10] sm:$0xff]
      %v283 = vld [vmem:[#allocation2 + $0x18] sm:$0xff]
      %v284 = vld [vmem:[#allocation3] sm:$0xff]
      %v285 = vld [vmem:[#allocation3 + $0x8] sm:$0xff]
      %v286 = vld [vmem:[#allocation3 + $0x10] sm:$0xff]
      %v287 = vld [vmem:[#allocation3 + $0x18] sm:$0xff]
      %v288 = vlog2.pop %v284
      %v289 = vmul.f32 %v288, 0.6931472
      %v290 = vlog2.pop %v285
      %v291 = vmul.f32 %v290, 0.6931472
      %v292 = vlog2.pop %v286
      %v293 = vmul.f32 %v292, 0.6931472
      %v294 = vlog2.pop %v287
      %v295 = vmul.f32 %v294, 0.6931472
      %v296 = vadd.f32 %v280, %v289
      %v297 = vadd.f32 %v281, %v291
      %v298 = vadd.f32 %v282, %v293
      %v299 = vadd.f32 %v283, %v295
      %v300 = vld [vmem:[#allocation4] sm:$0xf]
      %v301 = vld [vmem:[#allocation4 + $0x4] sm:$0xf]
      %v302 = vld [vmem:[#allocation4 + $0x8] sm:$0xf]
      %v303 = vld [vmem:[#allocation4 + $0xc] sm:$0xf]
      %v304 = vunpack.c.l.bf16 %v300
      %v305 = vunpack.c.l.bf16 %v301
      %v306 = vunpack.c.l.bf16 %v302
      %v307 = vunpack.c.l.bf16 %v303
      %v308 = vld [vmem:[#allocation7] sm:$0xf]
      %v309 = vld [vmem:[#allocation7 + $0x4] sm:$0xf]
      %v310 = vld [vmem:[#allocation7 + $0x8] sm:$0xf]
      %v311 = vld [vmem:[#allocation7 + $0xc] sm:$0xf]
      %v312 = vunpack.c.l.bf16 %v308
      %v313 = vunpack.c.l.bf16 %v309
      %v314 = vunpack.c.l.bf16 %v310
      %v315 = vunpack.c.l.bf16 %v311
      %v316 = vmul.f32 %v304, %v312
      %v317 = vmul.f32 %v305, %v313
      %v318 = vmul.f32 %v306, %v314
      %v319 = vmul.f32 %v307, %v315
      %v320 = vsel %vm108, %v316, 0.0
      %321 = vadd.xlane.f32.xlu0 %v320
      %v322 = vpop.xlane.xlu0 %321
      %v323 = vsel %vm108, %v317, 0.0
      %324 = vadd.xlane.f32.xlu0 %v323
      %v325 = vpop.xlane.xlu0 %324
      %v326 = vsel %vm108, %v318, 0.0
      %327 = vadd.xlane.f32.xlu0 %v326
      %v328 = vpop.xlane.xlu0 %327
      %v329 = vsel %vm108, %v319, 0.0
      %330 = vadd.xlane.f32.xlu0 %v329
      %v331 = vpop.xlane.xlu0 %330
      %v332 = vsub.f32 %v322, %v296
      %v333 = vsub.f32 %v325, %v297
      %v334 = vsub.f32 %v328, %v298
      %v335 = vsub.f32 %v331, %v299
      %v336 = vmax.f32 %v332, -46.0517
      %v337 = vmax.f32 %v333, -46.0517
      %v338 = vmax.f32 %v334, -46.0517
      %v339 = vmax.f32 %v335, -46.0517
      %341 = vset.pattern.permute.xlu0 0
      %342 = vperm.xlu0 %341, %v336
      %v343 = vpop.permute.xlu0 %342
      %346 = vset.pattern.permute.xlu0 0
      %347 = vperm.xlu0 %346, %v337
      %v348 = vpop.permute.xlu0 %347
      %351 = vset.pattern.permute.xlu0 0
      %352 = vperm.xlu0 %351, %v338
      %v353 = vpop.permute.xlu0 %352
      %356 = vset.pattern.permute.xlu0 0
      %357 = vperm.xlu0 %356, %v339
      %v358 = vpop.permute.xlu0 %357
      %360 = vst [vmem:[#allocation10] sm:$0xff] %v343
      %361 = vst [vmem:[#allocation10 + $0x8] sm:$0xff] %v348
      %362 = vst [vmem:[#allocation10 + $0x10] sm:$0xff] %v353
      %363 = vst [vmem:[#allocation10 + $0x18] sm:$0xff] %v358
    $region33: #{tpu_custom_call.1} parent=1 // pred_fallthru
      _
    // Predicated region
    $region34: #{tpu_custom_call.1} parent=1 // pred_check
      _
    $region35: #{tpu_custom_call.1} parent=1 // pred_check_branch
      %365 = sbr.rel (0) target = $region37
    $region36: #{tpu_custom_call.1} parent=1 // pred_region
      %s367 = ssub.s32 512, 512
      %368 = vsyncadd [#allocation6], %s367
      %s369 = sshll.u32 [#allocation10], 4
      %s370 = int_to_ptr.vmem [resolvable:$true] %s369
      %375 = dma.vmem_to_hbm [thread:$0]  %s370, 512, %s3, [#allocation6], 128, 128, 8
    $region37: #{tpu_custom_call.1} parent=1 // pred_fallthru
      _
    // Predicated region
    $region38: #{tpu_custom_call.1} parent=1 // pred_check
      _
    $region39: #{tpu_custom_call.1} parent=1 // pred_check_branch
      %377 = sbr.rel (0) target = $region41
    $region40: #{tpu_custom_call.1} parent=1 // pred_region
      %378 = dma.done [#allocation6], 512
    $region41: #{tpu_custom_call.1} parent=1 // pred_fallthru
      _
    %379 = vsyncpa [#allocation5], 1
    %380 = vsyncpa [#allocation8], 1
    %381 = vsyncpa [#allocation6], 1

</llo_original>
